<compile_context>
chip_gen: v7x
topology: tpu7x:2x2x1
jax: 0.10.0
libtpu: 0.0.40
codegen_flags: <defaults>
</compile_context>

<pallas_src>
import functools

import jax
import jax.numpy as jnp
import numpy as np
from jax.experimental import pallas as pl
from jax.experimental.pallas import tpu as pltpu


# ----------------------------- fused Pallas kernel -----------------------------

def _make_fused_kernel(n_resize):
    """Kernel over one batch block: mask level 0 + n_resize chained resizes."""

    def kernel(*refs):
        x_ref, valid_ref = refs[0], refs[1]
        p_refs = refs[2:2 + n_resize]
        out_refs = refs[2 + n_resize:]

        x = x_ref[...]                                   # (bblk, C, T)
        # feat0 = masked x (only place the valid multiply is needed).
        out_refs[0][...] = x * valid_ref[...]            # broadcast over C

        # Levels >= 1: interpolation rows for t >= L have zero weight, so the
        # matmul can consume the raw x tile directly.
        cur = x
        for p_ref, o_ref in zip(p_refs, out_refs[1:]):
            p = p_ref[...]                               # (bblk, 4, T_out) f32
            bblk = cur.shape[0]
            t_in = cur.shape[2]
            t_out = p.shape[2]

            i0 = p[:, 0:1, :].astype(jnp.int32)          # (bblk, 1, T_out)
            i1 = p[:, 1:2, :].astype(jnp.int32)
            w0 = p[:, 2:3, :]                            # already * valid-col
            w1 = p[:, 3:4, :]

            # Rebuild the (<=2 nonzeros / column) interpolation matrix in VMEM.
            t = jax.lax.broadcasted_iota(jnp.int32, (bblk, t_in, t_out), 1)
            w = (jnp.where(t == i0, w0, 0.0)
                 + jnp.where(t == i1, w1, 0.0))          # (bblk, T_in, T_out)

            cur = jnp.einsum(
                'bct,bto->bco', cur, w,
                preferred_element_type=jnp.float32).astype(o_ref.dtype)
            o_ref[...] = cur

    return kernel


# ----------------------------- wrapper-side index math -----------------------------

def _downsample_mask(mask):
    """F.interpolate(mask.float(), scale_factor=0.5, mode='linear') > 0.5.

    Exact 2x linear downsample (align_corners=False) == pairwise average.
    """
    T = mask.shape[1]
    T_out = T // 2
    mf = mask.astype(jnp.float32)
    avg = 0.5 * (mf[:, 0:2 * T_out:2] + mf[:, 1:2 * T_out:2])
    return avg > 0.5


def _interp_params(in_len, out_len, T_out):
    """Compact 2-tap linear-interp params, shape (B, 4, T_out) float32.

    Rows: [i0, i1, w0*valid_col, w1*valid_col].  Matches
    F.interpolate(x[:, :, :L], size=M, mode='linear', align_corners=False);
    columns j >= M carry zero weight so the padded output region stays zero.
    """
    Lf = in_len.astype(jnp.float32)[:, None]              # (B, 1)
    Mf = out_len.astype(jnp.float32)[:, None]              # (B, 1)
    j = jnp.arange(T_out, dtype=jnp.float32)[None, :]       # (1, T_out)

    scale = Lf / jnp.maximum(Mf, 1.0)
    real = jnp.maximum(scale * (j + 0.5) - 0.5, 0.0)        # (B, T_out)
    i0 = jnp.floor(real)
    w1 = real - i0
    w0 = 1.0 - w1
    i1 = jnp.minimum(i0 + 1.0, jnp.maximum(Lf - 1.0, 0.0))
    valid = (j < Mf).astype(jnp.float32)

    return jnp.stack([i0, i1, w0 * valid, w1 * valid], axis=1).astype(jnp.float32)


def _pick_batch_block(B, C, T, itemsize):
    """Samples per grid step: fill the 8-row sublane tile, keep x block small."""
    best = 1
    for bb in range(1, B + 1):
        if B % bb:
            continue
        if bb * C * T * itemsize > (2 << 20):
            break
        best = bb
        if bb * C >= 8:
            break
    return best


# ----------------------------- forward -----------------------------

@functools.partial(jax.jit, static_argnames=("num_feature_levels",))
def resizer_backbone_forward(x, mask, num_feature_levels=5):
    """ResizerBackbone.forward.

    x:    (B, C, T) float features
    mask: (B, T) bool, True = padded/invalid (valid positions form a prefix)
    Returns (resized_feats, resized_masks), each a tuple of num_feature_levels.
    """
    B, C, T = x.shape
    n_resize = num_feature_levels - 1
    itemsize = jnp.dtype(x.dtype).itemsize

    valid3 = jnp.logical_not(mask).astype(x.dtype)[:, None, :]   # (B, 1, T)

    # Per-level masks / lengths / compact interpolation params (cheap jnp math).
    masks = [mask]
    lens = [jnp.sum(jnp.logical_not(mask), axis=1)]
    t_dims = [T]
    params = []
    for _ in range(n_resize):
        nm = _downsample_mask(masks[-1])
        M = jnp.sum(jnp.logical_not(nm), axis=1)
        t_out = t_dims[-1] // 2
        params.append(_interp_params(lens[-1], M, t_out))
        masks.append(nm)
        lens.append(M)
        t_dims.append(t_out)

    bblk = _pick_batch_block(B, C, T, itemsize)
    grid = (B // bblk,)

    in_specs = [
        pl.BlockSpec((bblk, C, T), lambda i: (i, 0, 0)),
        pl.BlockSpec((bblk, 1, T), lambda i: (i, 0, 0)),
    ]
    for t_out in t_dims[1:]:
        in_specs.append(pl.BlockSpec((bblk, 4, t_out), lambda i: (i, 0, 0)))

    out_specs = tuple(
        pl.BlockSpec((bblk, C, t), lambda i: (i, 0, 0)) for t in t_dims)
    out_shape = tuple(
        jax.ShapeDtypeStruct((B, C, t), x.dtype) for t in t_dims)

    # VMEM footprint estimate (double-buffered I/O + on-the-fly interp matrix).
    in_bytes = bblk * (C * T * itemsize + T * itemsize
                       + sum(4 * t * 4 for t in t_dims[1:]))
    out_bytes = bblk * C * sum(t_dims) * itemsize
    w_bytes = bblk * T * (t_dims[1] if len(t_dims) > 1 else 0) * 4
    est = 2 * (in_bytes + out_bytes) + 2 * w_bytes
    vmem_limit = int(min(max(3 * est, 32 << 20), 64 << 20))

    feats = pl.pallas_call(
        _make_fused_kernel(n_resize),
        out_shape=out_shape,
        grid=grid,
        in_specs=in_specs,
        out_specs=out_specs,
        compiler_params=pltpu.CompilerParams(
            dimension_semantics=("parallel",),
            vmem_limit_bytes=vmem_limit),
    )(x, valid3, *params)

    return tuple(feats), tuple(masks)


# ----------------------------- test -----------------------------

if __name__ == "__main__":
    key = jax.random.PRNGKey(0)
    B, C, T = 2, 4, 32          # batch, feature_dim, sequence length
    num_feature_levels = 5

    x = jax.random.normal(key, (B, C, T), dtype=jnp.float32)
    valid_lens = jnp.asarray([32, 20], dtype=jnp.int32)
    mask = jnp.arange(T)[None, :] >= valid_lens[:, None]     # True = padding

    feats, masks = resizer_backbone_forward(
        x, mask, num_feature_levels=num_feature_levels)
    feats = jax.block_until_ready(feats)
    masks = jax.block_until_ready(masks)

    # ----- numpy reference replicating the PyTorch module semantics -----
    def np_linear_resize(arr, M):
        C_, L = arr.shape
        out = np.zeros((C_, M), dtype=np.float64)
        scale = L / M
        for j in range(M):
            real = max(scale * (j + 0.5) - 0.5, 0.0)
            i0 = int(np.floor(real))
            i1 = min(i0 + 1, L - 1)
            w1 = real - i0
            out[:, j] = (1.0 - w1) * arr[:, i0] + w1 * arr[:, i1]
        return out

    xn = np.asarray(x, dtype=np.float64)
    mn = np.asarray(mask)
    ref_f = [xn * (~mn)[:, None, :].astype(np.float64)]
    ref_m = [mn]
    for _ in range(num_feature_levels - 1):
        cf, cm = ref_f[-1], ref_m[-1]
        T_in = cf.shape[2]
        T_out = T_in // 2
        mf = cm.astype(np.float64)
        nm = 0.5 * (mf[:, 0:2 * T_out:2] + mf[:, 1:2 * T_out:2]) > 0.5
        nf = np.zeros((B, C, T_out), dtype=np.float64)
        for i in range(B):
            L = int((~cm[i]).sum())
            M = int((~nm[i]).sum())
            if L > 0 and M > 0:
                nf[i, :, :M] = np_linear_resize(cf[i, :, :L], M)
        ref_f.append(nf)
        ref_m.append(nm)

    for lvl in range(num_feature_levels):
        np.testing.assert_allclose(np.asarray(feats[lvl]), ref_f[lvl],
                                   rtol=1e-5, atol=1e-5)
        np.testing.assert_array_equal(np.asarray(masks[lvl]), ref_m[lvl])

    print("KERNEL_OK")
</pallas_src>

<mosaic_0001>
module attributes {stable_mosaic.version = 11 : i64} {
  func.func @kernel(%arg0: i32, %arg1: memref<2x4x32xf32, #tpu.memory_space<vmem>>, %arg2: memref<2x1x32xf32, #tpu.memory_space<vmem>>, %arg3: memref<2x4x16xf32, #tpu.memory_space<vmem>>, %arg4: memref<2x4x8xf32, #tpu.memory_space<vmem>>, %arg5: memref<2x4x4xf32, #tpu.memory_space<vmem>>, %arg6: memref<2x4x2xf32, #tpu.memory_space<vmem>>, %arg7: memref<2x4x32xf32, #tpu.memory_space<vmem>>, %arg8: memref<2x4x16xf32, #tpu.memory_space<vmem>>, %arg9: memref<2x4x8xf32, #tpu.memory_space<vmem>>, %arg10: memref<2x4x4xf32, #tpu.memory_space<vmem>>, %arg11: memref<2x4x2xf32, #tpu.memory_space<vmem>>) attributes {dimension_semantics = [#tpu.dimension_semantics<parallel>], iteration_bounds = array<i64: 1>, scalar_prefetch = 0 : i64, scratch_operands = 0 : i64, tpu.core_type = #tpu.core_type<tc>, window_params = [{transform_indices = @transform_0, window_bounds = array<i64: 2, 4, 32>}, {transform_indices = @transform_1, window_bounds = array<i64: 2, 1, 32>}, {transform_indices = @transform_2, window_bounds = array<i64: 2, 4, 16>}, {transform_indices = @transform_3, window_bounds = array<i64: 2, 4, 8>}, {transform_indices = @transform_4, window_bounds = array<i64: 2, 4, 4>}, {transform_indices = @transform_5, window_bounds = array<i64: 2, 4, 2>}, {transform_indices = @transform_6, window_bounds = array<i64: 2, 4, 32>}, {transform_indices = @transform_7, window_bounds = array<i64: 2, 4, 16>}, {transform_indices = @transform_8, window_bounds = array<i64: 2, 4, 8>}, {transform_indices = @transform_9, window_bounds = array<i64: 2, 4, 4>}, {transform_indices = @transform_10, window_bounds = array<i64: 2, 4, 2>}]} {
    %c0 = arith.constant 0 : index
    %c0_0 = arith.constant 0 : index
    %c0_1 = arith.constant 0 : index
    %0 = vector.load %arg1[%c0, %c0_0, %c0_1] : memref<2x4x32xf32, #tpu.memory_space<vmem>>, vector<2x4x32xf32>
    %c0_2 = arith.constant 0 : index
    %c0_3 = arith.constant 0 : index
    %c0_4 = arith.constant 0 : index
    %1 = vector.load %arg2[%c0_2, %c0_3, %c0_4] : memref<2x1x32xf32, #tpu.memory_space<vmem>>, vector<2x1x32xf32>
    %2 = vector.broadcast %1 : vector<2x1x32xf32> to vector<2x4x32xf32>
    %3 = arith.mulf %0, %2 : vector<2x4x32xf32>
    %c0_5 = arith.constant 0 : index
    %c0_6 = arith.constant 0 : index
    %c0_7 = arith.constant 0 : index
    %4 = vector.load %arg7[%c0_5, %c0_6, %c0_7] : memref<2x4x32xf32, #tpu.memory_space<vmem>>, vector<2x4x32xf32>
    tpu.vector_store %arg7[%c0_5, %c0_6, %c0_7], %3 {strides = array<i32>} : memref<2x4x32xf32, #tpu.memory_space<vmem>>, vector<2x4x32xf32>,
    %c0_8 = arith.constant 0 : index
    %c0_9 = arith.constant 0 : index
    %c0_10 = arith.constant 0 : index
    %5 = vector.load %arg3[%c0_8, %c0_9, %c0_10] : memref<2x4x16xf32, #tpu.memory_space<vmem>>, vector<2x4x16xf32>
    %6 = vector.extract_strided_slice %5 {offsets = [0, 0, 0], sizes = [2, 1, 16], strides = [1, 1, 1]} : vector<2x4x16xf32> to vector<2x1x16xf32>
    %7 = arith.fptosi %6 : vector<2x1x16xf32> to vector<2x1x16xi32>
    %8 = vector.extract_strided_slice %5 {offsets = [0, 1, 0], sizes = [2, 1, 16], strides = [1, 1, 1]} : vector<2x4x16xf32> to vector<2x1x16xf32>
    %9 = arith.fptosi %8 : vector<2x1x16xf32> to vector<2x1x16xi32>
    %10 = vector.extract_strided_slice %5 {offsets = [0, 2, 0], sizes = [2, 1, 16], strides = [1, 1, 1]} : vector<2x4x16xf32> to vector<2x1x16xf32>
    %11 = vector.extract_strided_slice %5 {offsets = [0, 3, 0], sizes = [2, 1, 16], strides = [1, 1, 1]} : vector<2x4x16xf32> to vector<2x1x16xf32>
    %12 = tpu.iota {dimensions = array<i32: 1>} : vector<2x32x16xi32>
    %13 = vector.broadcast %7 : vector<2x1x16xi32> to vector<2x32x16xi32>
    %14 = arith.cmpi eq, %12, %13 : vector<2x32x16xi32>
    %cst = arith.constant 0.000000e+00 : f32
    %15 = vector.shape_cast %10 : vector<2x1x16xf32> to vector<2x1x16xf32>
    %16 = vector.broadcast %15 : vector<2x1x16xf32> to vector<2x32x16xf32>
    %17 = vector.broadcast %cst : f32 to vector<2x32x16xf32>
    %18 = arith.select %14, %16, %17 : vector<2x32x16xi1>, vector<2x32x16xf32>
    %19 = vector.broadcast %9 : vector<2x1x16xi32> to vector<2x32x16xi32>
    %20 = arith.cmpi eq, %12, %19 : vector<2x32x16xi32>
    %cst_11 = arith.constant 0.000000e+00 : f32
    %21 = vector.shape_cast %11 : vector<2x1x16xf32> to vector<2x1x16xf32>
    %22 = vector.broadcast %21 : vector<2x1x16xf32> to vector<2x32x16xf32>
    %23 = vector.broadcast %cst_11 : f32 to vector<2x32x16xf32>
    %24 = arith.select %20, %22, %23 : vector<2x32x16xi1>, vector<2x32x16xf32>
    %25 = arith.addf %18, %24 : vector<2x32x16xf32>
    "tpu.trace_start"() <{level = 10 : i32, message = "bct,bto->bco"}> : () -> ()
    %cst_12 = arith.constant dense<0.000000e+00> : vector<2x4x16xf32>
    %26 = tpu.matmul %0, %25, %cst_12 {dimension_numbers = #tpu.dot_dimension_numbers<[2], [1], [1], [2], [0, 0, 0, 1, 1, 2], [0], [0]>} : vector<2x4x32xf32>, vector<2x32x16xf32>, vector<2x4x16xf32> -> vector<2x4x16xf32>
    "tpu.trace_stop"() : () -> ()
    %c0_13 = arith.constant 0 : index
    %c0_14 = arith.constant 0 : index
    %c0_15 = arith.constant 0 : index
    %27 = vector.load %arg8[%c0_13, %c0_14, %c0_15] : memref<2x4x16xf32, #tpu.memory_space<vmem>>, vector<2x4x16xf32>
    tpu.vector_store %arg8[%c0_13, %c0_14, %c0_15], %26 {strides = array<i32>} : memref<2x4x16xf32, #tpu.memory_space<vmem>>, vector<2x4x16xf32>,
    %c0_16 = arith.constant 0 : index
    %c0_17 = arith.constant 0 : index
    %c0_18 = arith.constant 0 : index
    %28 = vector.load %arg4[%c0_16, %c0_17, %c0_18] : memref<2x4x8xf32, #tpu.memory_space<vmem>>, vector<2x4x8xf32>
    %29 = vector.extract_strided_slice %28 {offsets = [0, 0, 0], sizes = [2, 1, 8], strides = [1, 1, 1]} : vector<2x4x8xf32> to vector<2x1x8xf32>
    %30 = arith.fptosi %29 : vector<2x1x8xf32> to vector<2x1x8xi32>
    %31 = vector.extract_strided_slice %28 {offsets = [0, 1, 0], sizes = [2, 1, 8], strides = [1, 1, 1]} : vector<2x4x8xf32> to vector<2x1x8xf32>
    %32 = arith.fptosi %31 : vector<2x1x8xf32> to vector<2x1x8xi32>
    %33 = vector.extract_strided_slice %28 {offsets = [0, 2, 0], sizes = [2, 1, 8], strides = [1, 1, 1]} : vector<2x4x8xf32> to vector<2x1x8xf32>
    %34 = vector.extract_strided_slice %28 {offsets = [0, 3, 0], sizes = [2, 1, 8], strides = [1, 1, 1]} : vector<2x4x8xf32> to vector<2x1x8xf32>
    %35 = tpu.iota {dimensions = array<i32: 1>} : vector<2x16x8xi32>
    %36 = vector.broadcast %30 : vector<2x1x8xi32> to vector<2x16x8xi32>
    %37 = arith.cmpi eq, %35, %36 : vector<2x16x8xi32>
    %cst_19 = arith.constant 0.000000e+00 : f32
    %38 = vector.shape_cast %33 : vector<2x1x8xf32> to vector<2x1x8xf32>
    %39 = vector.broadcast %38 : vector<2x1x8xf32> to vector<2x16x8xf32>
    %40 = vector.broadcast %cst_19 : f32 to vector<2x16x8xf32>
    %41 = arith.select %37, %39, %40 : vector<2x16x8xi1>, vector<2x16x8xf32>
    %42 = vector.broadcast %32 : vector<2x1x8xi32> to vector<2x16x8xi32>
    %43 = arith.cmpi eq, %35, %42 : vector<2x16x8xi32>
    %cst_20 = arith.constant 0.000000e+00 : f32
    %44 = vector.shape_cast %34 : vector<2x1x8xf32> to vector<2x1x8xf32>
    %45 = vector.broadcast %44 : vector<2x1x8xf32> to vector<2x16x8xf32>
    %46 = vector.broadcast %cst_20 : f32 to vector<2x16x8xf32>
    %47 = arith.select %43, %45, %46 : vector<2x16x8xi1>, vector<2x16x8xf32>
    %48 = arith.addf %41, %47 : vector<2x16x8xf32>
    "tpu.trace_start"() <{level = 10 : i32, message = "bct,bto->bco"}> : () -> ()
    %cst_21 = arith.constant dense<0.000000e+00> : vector<2x4x8xf32>
    %49 = tpu.matmul %26, %48, %cst_21 {dimension_numbers = #tpu.dot_dimension_numbers<[2], [1], [1], [2], [0, 0, 0, 1, 1, 2], [0], [0]>} : vector<2x4x16xf32>, vector<2x16x8xf32>, vector<2x4x8xf32> -> vector<2x4x8xf32>
    "tpu.trace_stop"() : () -> ()
    %c0_22 = arith.constant 0 : index
    %c0_23 = arith.constant 0 : index
    %c0_24 = arith.constant 0 : index
    %50 = vector.load %arg9[%c0_22, %c0_23, %c0_24] : memref<2x4x8xf32, #tpu.memory_space<vmem>>, vector<2x4x8xf32>
    tpu.vector_store %arg9[%c0_22, %c0_23, %c0_24], %49 {strides = array<i32>} : memref<2x4x8xf32, #tpu.memory_space<vmem>>, vector<2x4x8xf32>,
    %c0_25 = arith.constant 0 : index
    %c0_26 = arith.constant 0 : index
    %c0_27 = arith.constant 0 : index
    %51 = vector.load %arg5[%c0_25, %c0_26, %c0_27] : memref<2x4x4xf32, #tpu.memory_space<vmem>>, vector<2x4x4xf32>
    %52 = vector.extract_strided_slice %51 {offsets = [0, 0, 0], sizes = [2, 1, 4], strides = [1, 1, 1]} : vector<2x4x4xf32> to vector<2x1x4xf32>
    %53 = arith.fptosi %52 : vector<2x1x4xf32> to vector<2x1x4xi32>
    %54 = vector.extract_strided_slice %51 {offsets = [0, 1, 0], sizes = [2, 1, 4], strides = [1, 1, 1]} : vector<2x4x4xf32> to vector<2x1x4xf32>
    %55 = arith.fptosi %54 : vector<2x1x4xf32> to vector<2x1x4xi32>
    %56 = vector.extract_strided_slice %51 {offsets = [0, 2, 0], sizes = [2, 1, 4], strides = [1, 1, 1]} : vector<2x4x4xf32> to vector<2x1x4xf32>
    %57 = vector.extract_strided_slice %51 {offsets = [0, 3, 0], sizes = [2, 1, 4], strides = [1, 1, 1]} : vector<2x4x4xf32> to vector<2x1x4xf32>
    %58 = tpu.iota {dimensions = array<i32: 1>} : vector<2x8x4xi32>
    %59 = vector.broadcast %53 : vector<2x1x4xi32> to vector<2x8x4xi32>
    %60 = arith.cmpi eq, %58, %59 : vector<2x8x4xi32>
    %cst_28 = arith.constant 0.000000e+00 : f32
    %61 = vector.shape_cast %56 : vector<2x1x4xf32> to vector<2x1x4xf32>
    %62 = vector.broadcast %61 : vector<2x1x4xf32> to vector<2x8x4xf32>
    %63 = vector.broadcast %cst_28 : f32 to vector<2x8x4xf32>
    %64 = arith.select %60, %62, %63 : vector<2x8x4xi1>, vector<2x8x4xf32>
    %65 = vector.broadcast %55 : vector<2x1x4xi32> to vector<2x8x4xi32>
    %66 = arith.cmpi eq, %58, %65 : vector<2x8x4xi32>
    %cst_29 = arith.constant 0.000000e+00 : f32
    %67 = vector.shape_cast %57 : vector<2x1x4xf32> to vector<2x1x4xf32>
    %68 = vector.broadcast %67 : vector<2x1x4xf32> to vector<2x8x4xf32>
    %69 = vector.broadcast %cst_29 : f32 to vector<2x8x4xf32>
    %70 = arith.select %66, %68, %69 : vector<2x8x4xi1>, vector<2x8x4xf32>
    %71 = arith.addf %64, %70 : vector<2x8x4xf32>
    "tpu.trace_start"() <{level = 10 : i32, message = "bct,bto->bco"}> : () -> ()
    %cst_30 = arith.constant dense<0.000000e+00> : vector<2x4x4xf32>
    %72 = tpu.matmul %49, %71, %cst_30 {dimension_numbers = #tpu.dot_dimension_numbers<[2], [1], [1], [2], [0, 0, 0, 1, 1, 2], [0], [0]>} : vector<2x4x8xf32>, vector<2x8x4xf32>, vector<2x4x4xf32> -> vector<2x4x4xf32>
    "tpu.trace_stop"() : () -> ()
    %c0_31 = arith.constant 0 : index
    %c0_32 = arith.constant 0 : index
    %c0_33 = arith.constant 0 : index
    %73 = vector.load %arg10[%c0_31, %c0_32, %c0_33] : memref<2x4x4xf32, #tpu.memory_space<vmem>>, vector<2x4x4xf32>
    tpu.vector_store %arg10[%c0_31, %c0_32, %c0_33], %72 {strides = array<i32>} : memref<2x4x4xf32, #tpu.memory_space<vmem>>, vector<2x4x4xf32>,
    %c0_34 = arith.constant 0 : index
    %c0_35 = arith.constant 0 : index
    %c0_36 = arith.constant 0 : index
    %74 = vector.load %arg6[%c0_34, %c0_35, %c0_36] : memref<2x4x2xf32, #tpu.memory_space<vmem>>, vector<2x4x2xf32>
    %75 = vector.extract_strided_slice %74 {offsets = [0, 0, 0], sizes = [2, 1, 2], strides = [1, 1, 1]} : vector<2x4x2xf32> to vector<2x1x2xf32>
    %76 = arith.fptosi %75 : vector<2x1x2xf32> to vector<2x1x2xi32>
    %77 = vector.extract_strided_slice %74 {offsets = [0, 1, 0], sizes = [2, 1, 2], strides = [1, 1, 1]} : vector<2x4x2xf32> to vector<2x1x2xf32>
    %78 = arith.fptosi %77 : vector<2x1x2xf32> to vector<2x1x2xi32>
    %79 = vector.extract_strided_slice %74 {offsets = [0, 2, 0], sizes = [2, 1, 2], strides = [1, 1, 1]} : vector<2x4x2xf32> to vector<2x1x2xf32>
    %80 = vector.extract_strided_slice %74 {offsets = [0, 3, 0], sizes = [2, 1, 2], strides = [1, 1, 1]} : vector<2x4x2xf32> to vector<2x1x2xf32>
    %81 = tpu.iota {dimensions = array<i32: 1>} : vector<2x4x2xi32>
    %82 = vector.broadcast %76 : vector<2x1x2xi32> to vector<2x4x2xi32>
    %83 = arith.cmpi eq, %81, %82 : vector<2x4x2xi32>
    %cst_37 = arith.constant 0.000000e+00 : f32
    %84 = vector.shape_cast %79 : vector<2x1x2xf32> to vector<2x1x2xf32>
    %85 = vector.broadcast %84 : vector<2x1x2xf32> to vector<2x4x2xf32>
    %86 = vector.broadcast %cst_37 : f32 to vector<2x4x2xf32>
    %87 = arith.select %83, %85, %86 : vector<2x4x2xi1>, vector<2x4x2xf32>
    %88 = vector.broadcast %78 : vector<2x1x2xi32> to vector<2x4x2xi32>
    %89 = arith.cmpi eq, %81, %88 : vector<2x4x2xi32>
    %cst_38 = arith.constant 0.000000e+00 : f32
    %90 = vector.shape_cast %80 : vector<2x1x2xf32> to vector<2x1x2xf32>
    %91 = vector.broadcast %90 : vector<2x1x2xf32> to vector<2x4x2xf32>
    %92 = vector.broadcast %cst_38 : f32 to vector<2x4x2xf32>
    %93 = arith.select %89, %91, %92 : vector<2x4x2xi1>, vector<2x4x2xf32>
    %94 = arith.addf %87, %93 : vector<2x4x2xf32>
    "tpu.trace_start"() <{level = 10 : i32, message = "bct,bto->bco"}> : () -> ()
    %cst_39 = arith.constant dense<0.000000e+00> : vector<2x4x2xf32>
    %95 = tpu.matmul %72, %94, %cst_39 {dimension_numbers = #tpu.dot_dimension_numbers<[2], [1], [1], [2], [0, 0, 0, 1, 1, 2], [0], [0]>} : vector<2x4x4xf32>, vector<2x4x2xf32>, vector<2x4x2xf32> -> vector<2x4x2xf32>
    "tpu.trace_stop"() : () -> ()
    %c0_40 = arith.constant 0 : index
    %c0_41 = arith.constant 0 : index
    %c0_42 = arith.constant 0 : index
    %96 = vector.load %arg11[%c0_40, %c0_41, %c0_42] : memref<2x4x2xf32, #tpu.memory_space<vmem>>, vector<2x4x2xf32>
    tpu.vector_store %arg11[%c0_40, %c0_41, %c0_42], %95 {strides = array<i32>} : memref<2x4x2xf32, #tpu.memory_space<vmem>>, vector<2x4x2xf32>,
    return
  }
  func.func @transform_0(%arg0: i32) -> (i32, i32, i32) {
    %c0_i32 = arith.constant 0 : i32
    %c0_i32_0 = arith.constant 0 : i32
    %c0_i32_1 = arith.constant 0 : i32
    return %arg0, %c0_i32, %c0_i32_0 : i32, i32, i32
  }
  func.func @transform_1(%arg0: i32) -> (i32, i32, i32) {
    %c0_i32 = arith.constant 0 : i32
    %c0_i32_0 = arith.constant 0 : i32
    %c0_i32_1 = arith.constant 0 : i32
    return %arg0, %c0_i32, %c0_i32_0 : i32, i32, i32
  }
  func.func @transform_2(%arg0: i32) -> (i32, i32, i32) {
    %c0_i32 = arith.constant 0 : i32
    %c0_i32_0 = arith.constant 0 : i32
    %c0_i32_1 = arith.constant 0 : i32
    return %arg0, %c0_i32, %c0_i32_0 : i32, i32, i32
  }
  func.func @transform_3(%arg0: i32) -> (i32, i32, i32) {
    %c0_i32 = arith.constant 0 : i32
    %c0_i32_0 = arith.constant 0 : i32
    %c0_i32_1 = arith.constant 0 : i32
    return %arg0, %c0_i32, %c0_i32_0 : i32, i32, i32
  }
  func.func @transform_4(%arg0: i32) -> (i32, i32, i32) {
    %c0_i32 = arith.constant 0 : i32
    %c0_i32_0 = arith.constant 0 : i32
    %c0_i32_1 = arith.constant 0 : i32
    return %arg0, %c0_i32, %c0_i32_0 : i32, i32, i32
  }
  func.func @transform_5(%arg0: i32) -> (i32, i32, i32) {
    %c0_i32 = arith.constant 0 : i32
    %c0_i32_0 = arith.constant 0 : i32
    %c0_i32_1 = arith.constant 0 : i32
    return %arg0, %c0_i32, %c0_i32_0 : i32, i32, i32
  }
  func.func @transform_6(%arg0: i32) -> (i32, i32, i32) {
    %c0_i32 = arith.constant 0 : i32
    %c0_i32_0 = arith.constant 0 : i32
    %c0_i32_1 = arith.constant 0 : i32
    return %arg0, %c0_i32, %c0_i32_0 : i32, i32, i32
  }
  func.func @transform_7(%arg0: i32) -> (i32, i32, i32) {
    %c0_i32 = arith.constant 0 : i32
    %c0_i32_0 = arith.constant 0 : i32
    %c0_i32_1 = arith.constant 0 : i32
    return %arg0, %c0_i32, %c0_i32_0 : i32, i32, i32
  }
  func.func @transform_8(%arg0: i32) -> (i32, i32, i32) {
    %c0_i32 = arith.constant 0 : i32
    %c0_i32_0 = arith.constant 0 : i32
    %c0_i32_1 = arith.constant 0 : i32
    return %arg0, %c0_i32, %c0_i32_0 : i32, i32, i32
  }
  func.func @transform_9(%arg0: i32) -> (i32, i32, i32) {
    %c0_i32 = arith.constant 0 : i32
    %c0_i32_0 = arith.constant 0 : i32
    %c0_i32_1 = arith.constant 0 : i32
    return %arg0, %c0_i32, %c0_i32_0 : i32, i32, i32
  }
  func.func @transform_10(%arg0: i32) -> (i32, i32, i32) {
    %c0_i32 = arith.constant 0 : i32
    %c0_i32_0 = arith.constant 0 : i32
    %c0_i32_1 = arith.constant 0 : i32
    return %arg0, %c0_i32, %c0_i32_0 : i32, i32, i32
  }
}

</mosaic_0001>

<llo_original>
// kernel: resizer_backbone_forward.1
$region0: #{resizer_backbone_forward.1}
  #allocation0 [shape = 'u32[]', space=smem, size = 0x4, offset = 0x4, fixed_abs, tag = 'smem constant byte address 0x4 - core index']
  #allocation1 [shape = 'u32[144,128]{1,0:T(1,128)}', space=vmem, size = 0x12000, scoped, tag = 'internal scratch']
  %s0 = inlined_call_operand.vmem [shape: f32[2,4,32], index: 0, kind: input, shape index: {}]
  %s1 = inlined_call_operand.vmem [shape: f32[2,1,32], index: 1, kind: input, shape index: {}]
  %s2 = inlined_call_operand.vmem [shape: f32[2,4,16], index: 2, kind: input, shape index: {}]
  %s3 = inlined_call_operand.vmem [shape: f32[2,4,8], index: 3, kind: input, shape index: {}]
  %s4 = inlined_call_operand.vmem [shape: f32[2,4,4], index: 4, kind: input, shape index: {}]
  %s5 = inlined_call_operand.vmem [shape: f32[2,4,2], index: 5, kind: input, shape index: {}]
  %s6 = inlined_call_operand.hbm [shape: f32[2,4,32], index: 6, kind: output, shape index: {0}]
  %s7 = inlined_call_operand.hbm [shape: f32[2,4,16], index: 7, kind: output, shape index: {1}]
  %s8 = inlined_call_operand.hbm [shape: f32[2,4,8], index: 8, kind: output, shape index: {2}]
  %s9 = inlined_call_operand.hbm [shape: f32[2,4,4], index: 9, kind: output, shape index: {3}]
  %s10 = inlined_call_operand.vmem [shape: f32[2,4,2], index: 10, kind: output, shape index: {4}]
  %11 = xla_tuple %s6, %s7, %s8, %s9, %s10
  %s12 = sld [smem:[#allocation0]]
  $region66: #{resizer_backbone_forward.1} parent=0
    _
  %s14 = ssub.s32 1, %s12
  %s15 = scalar_select 0, %s14, %s12
  $region1: #{resizer_backbone_forward.1} parent=0
    #allocation2 [shape = 'u8[4096]{0}', space=vmem, size = 0x1000, scoped, tag = 'output window, operand 0, single buffered']
    #allocation3 [shape = 's32[1]{0}', space=sflag, size = 0x4, scoped, tag = 'scoped memory for resizer_backbone_forward.1']
    #allocation4 [shape = 'u8[4096]{0}', space=vmem, size = 0x1000, scoped, tag = 'output window, operand 1, single buffered']
    #allocation5 [shape = 's32[1]{0}', space=sflag, size = 0x4, scoped, tag = 'scoped memory for resizer_backbone_forward.1']
    #allocation6 [shape = 'u8[4096]{0}', space=vmem, size = 0x1000, scoped, tag = 'output window, operand 2, single buffered']
    #allocation7 [shape = 'u8[4096]{0}', space=vmem, size = 0x1000, scoped, tag = 'output window, operand 3, single buffered']
    #allocation8 [shape = 's32[1]{0}', space=sflag, size = 0x4, scoped, tag = 'scoped memory for resizer_backbone_forward.1']
    %16 = vsyncpa [#allocation3], 0
    %17 = vsyncpa [#allocation5], 0
    %18 = vsyncpa [#allocation8], 0
    // Predicated region
    $region2: #{resizer_backbone_forward.1} parent=1 // pred_check
      _
    $region3: #{resizer_backbone_forward.1} parent=1 // pred_check_branch
      %20 = sbr.rel (0) target = $region5
    $region4: #{resizer_backbone_forward.1} parent=1 // pred_region
      _
    $region5: #{resizer_backbone_forward.1} parent=1 // pred_fallthru
      _
    // Predicated region
    $region6: #{resizer_backbone_forward.1} parent=1 // pred_check
      _
    $region7: #{resizer_backbone_forward.1} parent=1 // pred_check_branch
      %22 = sbr.rel (0) target = $region9
    $region8: #{resizer_backbone_forward.1} parent=1 // pred_region
      _
    $region9: #{resizer_backbone_forward.1} parent=1 // pred_fallthru
      _
    // Predicated region
    $region10: #{resizer_backbone_forward.1} parent=1 // pred_check
      _
    $region11: #{resizer_backbone_forward.1} parent=1 // pred_check_branch
      %24 = sbr.rel (0) target = $region13
    $region12: #{resizer_backbone_forward.1} parent=1 // pred_region
      _
    $region13: #{resizer_backbone_forward.1} parent=1 // pred_fallthru
      _
    // Predicated region
    $region14: #{resizer_backbone_forward.1} parent=1 // pred_check
      _
    $region15: #{resizer_backbone_forward.1} parent=1 // pred_check_branch
      %26 = sbr.rel (0) target = $region17
    $region16: #{resizer_backbone_forward.1} parent=1 // pred_region
      _
    $region17: #{resizer_backbone_forward.1} parent=1 // pred_fallthru
      _
    // Predicated region
    $region18: #{resizer_backbone_forward.1} parent=1 // pred_check
      _
    $region19: #{resizer_backbone_forward.1} parent=1 // pred_check_branch
      %28 = sbr.rel (0) target = $region21
    $region20: #{resizer_backbone_forward.1} parent=1 // pred_region
      _
    $region21: #{resizer_backbone_forward.1} parent=1 // pred_fallthru
      _
    // Predicated region
    $region22: #{resizer_backbone_forward.1} parent=1 // pred_check
      _
    $region23: #{resizer_backbone_forward.1} parent=1 // pred_check_branch
      %30 = sbr.rel (0) target = $region25
    $region24: #{resizer_backbone_forward.1} parent=1 // pred_region
      _
    $region25: #{resizer_backbone_forward.1} parent=1 // pred_fallthru
      _
    %v31 = vld [vmem:[%s0] sm:$0xf]
    %v32 = vld [vmem:[%s0 + $0x4] sm:$0xf]
    %v33 = vld [vmem:[%s1] sm:$0x1]
    %v34 = vld [vmem:[%s1 + $0x1] sm:$0x1]
    %v37 = vlaneseq
    %v38 = vshrl.u32 %v37, 7
    %v39 = vsub.s32 0, %v38
    %v40 = vrot.slane %v33, %v39
    %v41 = vlaneseq
    %v42 = vshrl.u32 %v41, 7
    %v43 = vsub.s32 0, %v42
    %v44 = vrot.slane %v34, %v43
    %v47 = vmul.f32 %v31, %v40
    %v48 = vmul.f32 %v32, %v44
    %vm49 = vcmask 257024
    %50 = vst.msk [vmem:[#allocation2] sm:$0xf] %vm49, %v47
    %51 = vst.msk [vmem:[#allocation2 + $0x4] sm:$0xf] %vm49, %v48
    %v52 = vld [vmem:[%s2] sm:$0xf]
    %v53 = vld [vmem:[%s2 + $0x4] sm:$0xf]
    %v54 = vcvt.f32.s32.to.zero.pseudo %v52
    %v55 = vcvt.f32.s32.to.zero.pseudo %v53
    %v56 = vlaneseq
    %v57 = vshrl.u32 %v56, 7
    %v58 = vadd.s32 %v57, 8
    %v59 = vadd.s32 %v57, 16
    %v60 = vadd.s32 %v57, 24
    %v61 = vlaneseq
    %v62 = vshrl.u32 %v61, 7
    %v63 = vsub.s32 0, %v62
    %v64 = vrot.slane %v54, %v63
    %v65 = vlaneseq
    %v66 = vshrl.u32 %v65, 7
    %v67 = vsub.s32 0, %v66
    %v68 = vrot.slane %v55, %v67
    %vm69 = vcmp.eq.s32.totalorder %v57, %v64
    %vm70 = vcmp.eq.s32.totalorder %v58, %v64
    %vm71 = vcmp.eq.s32.totalorder %v59, %v64
    %vm72 = vcmp.eq.s32.totalorder %v60, %v64
    %vm73 = vcmp.eq.s32.totalorder %v57, %v68
    %vm74 = vcmp.eq.s32.totalorder %v58, %v68
    %vm75 = vcmp.eq.s32.totalorder %v59, %v68
    %vm76 = vcmp.eq.s32.totalorder %v60, %v68
    %v77 = vlaneseq
    %v78 = vshrl.u32 %v77, 7
    %v79 = vsub.s32 2, %v78
    %v80 = vrot.slane %v52, %v79
    %v81 = vlaneseq
    %v82 = vshrl.u32 %v81, 7
    %v83 = vsub.s32 2, %v82
    %v84 = vrot.slane %v53, %v83
    %v85 = vsel %vm69, %v80, 0.0
    %v86 = vsel %vm70, %v80, 0.0
    %v87 = vsel %vm71, %v80, 0.0
    %v88 = vsel %vm72, %v80, 0.0
    %v89 = vsel %vm73, %v84, 0.0
    %v90 = vsel %vm74, %v84, 0.0
    %v91 = vsel %vm75, %v84, 0.0
    %v92 = vsel %vm76, %v84, 0.0
    %v93 = vlaneseq
    %v94 = vshrl.u32 %v93, 7
    %v95 = vsub.s32 1, %v94
    %v96 = vrot.slane %v54, %v95
    %v97 = vlaneseq
    %v98 = vshrl.u32 %v97, 7
    %v99 = vsub.s32 1, %v98
    %v100 = vrot.slane %v55, %v99
    %vm101 = vcmp.eq.s32.totalorder %v57, %v96
    %vm102 = vcmp.eq.s32.totalorder %v58, %v96
    %vm103 = vcmp.eq.s32.totalorder %v59, %v96
    %vm104 = vcmp.eq.s32.totalorder %v60, %v96
    %vm105 = vcmp.eq.s32.totalorder %v57, %v100
    %vm106 = vcmp.eq.s32.totalorder %v58, %v100
    %vm107 = vcmp.eq.s32.totalorder %v59, %v100
    %vm108 = vcmp.eq.s32.totalorder %v60, %v100
    %v109 = vlaneseq
    %v110 = vshrl.u32 %v109, 7
    %v111 = vsub.s32 3, %v110
    %v112 = vrot.slane %v52, %v111
    %v113 = vlaneseq
    %v114 = vshrl.u32 %v113, 7
    %v115 = vsub.s32 3, %v114
    %v116 = vrot.slane %v53, %v115
    %v117 = vsel %vm101, %v112, 0.0
    %v118 = vsel %vm102, %v112, 0.0
    %v119 = vsel %vm103, %v112, 0.0
    %v120 = vsel %vm104, %v112, 0.0
    %v121 = vsel %vm105, %v116, 0.0
    %v122 = vsel %vm106, %v116, 0.0
    %v123 = vsel %vm107, %v116, 0.0
    %v124 = vsel %vm108, %v116, 0.0
    %v125 = vadd.f32 %v85, %v117
    %v126 = vadd.f32 %v86, %v118
    %v127 = vadd.f32 %v87, %v119
    %v128 = vadd.f32 %v88, %v120
    %v129 = vadd.f32 %v89, %v121
    %v130 = vadd.f32 %v90, %v122
    %v131 = vadd.f32 %v91, %v123
    %v132 = vadd.f32 %v92, %v124
    %vm133 = vcmask 261120
    %v135 = vsel %vm133, %v31, 0
    %137 = vmatprep.subr.mxu0 0.0
    %138 = vmatpush1.msra.mxu0 %v125
    %139 = vmatprep.subr.mxu0 0.0
    %140 = vmatpush1.msra.mxu0 %v126
    %141 = vmatprep.subr.mxu0 0.0
    %142 = vmatpush1.msra.mxu0 %v127
    %143 = vmatprep.subr.mxu0 0.0
    %144 = vmatpush1.msra.mxu0 %v128
    %145 = vmatprep.subr.mxu0 0.0
    %146 = vmatpush1.msra.mxu0 0.0
    %147 = vmatprep.subr.mxu0 0.0
    %148 = vmatpush1.msra.mxu0 0.0
    %149 = vmatprep.subr.mxu0 0.0
    %150 = vmatpush1.msra.mxu0 0.0
    %151 = vmatprep.subr.mxu0 0.0
    %152 = vmatpush1.msra.mxu0 0.0
    %153 = vmatprep.subr.mxu0 0.0
    %154 = vmatpush1.msra.mxu0 0.0
    %155 = vmatprep.subr.mxu0 0.0
    %156 = vmatpush1.msra.mxu0 0.0
    %157 = vmatprep.subr.mxu0 0.0
    %158 = vmatpush1.msra.mxu0 0.0
    %159 = vmatprep.subr.mxu0 0.0
    %160 = vmatpush1.msra.mxu0 0.0
    %161 = vmatprep.subr.mxu0 0.0
    %162 = vmatpush1.msra.mxu0 0.0
    %163 = vmatprep.subr.mxu0 0.0
    %164 = vmatpush1.msra.mxu0 0.0
    %165 = vmatprep.subr.mxu0 0.0
    %166 = vmatpush1.msra.mxu0 0.0
    %167 = vmatprep.subr.mxu0 0.0
    %168 = vmatpush1.msra.mxu0 0.0
    %169 = vmatprep.subr.mxu0 0.0
    %170 = vmatpush1.msra.mxu0 0.0
    %171 = vmatprep.subr.mxu0 0.0
    %172 = vmatpush1.msra.mxu0 0.0
    %173 = vmatprep.subr.mxu0 0.0
    %174 = vmatpush1.msra.mxu0 0.0
    %175 = vmatprep.subr.mxu0 0.0
    %176 = vmatpush1.msra.mxu0 0.0
    %177 = vmatprep.subr.mxu0 0.0
    %178 = vmatpush1.msra.mxu0 0.0
    %179 = vmatprep.subr.mxu0 0.0
    %180 = vmatpush1.msra.mxu0 0.0
    %181 = vmatprep.subr.mxu0 0.0
    %182 = vmatpush1.msra.mxu0 0.0
    %183 = vmatprep.subr.mxu0 0.0
    %184 = vmatpush1.msra.mxu0 0.0
    %185 = vmatprep.subr.mxu0 0.0
    %186 = vmatpush1.msra.mxu0 0.0
    %187 = vmatprep.subr.mxu0 0.0
    %188 = vmatpush1.msra.mxu0 0.0
    %189 = vmatprep.subr.mxu0 0.0
    %190 = vmatpush1.msra.mxu0 0.0
    %191 = vmatprep.subr.mxu0 0.0
    %192 = vmatpush1.msra.mxu0 0.0
    %193 = vmatprep.subr.mxu0 0.0
    %194 = vmatpush1.msra.mxu0 0.0
    %195 = vmatprep.subr.mxu0 0.0
    %196 = vmatpush1.msra.mxu0 0.0
    %197 = vmatprep.subr.mxu0 0.0
    %198 = vmatpush1.msra.mxu0 0.0
    %199 = vmatprep.subr.mxu0 0.0
    %200 = vmatpush1.msra.mxu0 0.0
    %201 = vmatprep.mubr.f32.mxu0 0.0
    %202 = vmatmul.mubr.f32.gmra.mrb[0].mxu0 %v135
    %v203 = vpop.f32.mrb[0].mxu0
    %v204 = vadd.f32 0.0, %v203
    %v205 = vpop.f32.mrb[0].mxu0
    %206 = vdwg.mxu0
    %v208 = vsel %vm133, %v32, 0
    %210 = vmatprep.subr.mxu0 0.0
    %211 = vmatpush1.msra.mxu0 %v129
    %212 = vmatprep.subr.mxu0 0.0
    %213 = vmatpush1.msra.mxu0 %v130
    %214 = vmatprep.subr.mxu0 0.0
    %215 = vmatpush1.msra.mxu0 %v131
    %216 = vmatprep.subr.mxu0 0.0
    %217 = vmatpush1.msra.mxu0 %v132
    %218 = vmatprep.subr.mxu0 0.0
    %219 = vmatpush1.msra.mxu0 0.0
    %220 = vmatprep.subr.mxu0 0.0
    %221 = vmatpush1.msra.mxu0 0.0
    %222 = vmatprep.subr.mxu0 0.0
    %223 = vmatpush1.msra.mxu0 0.0
    %224 = vmatprep.subr.mxu0 0.0
    %225 = vmatpush1.msra.mxu0 0.0
    %226 = vmatprep.subr.mxu0 0.0
    %227 = vmatpush1.msra.mxu0 0.0
    %228 = vmatprep.subr.mxu0 0.0
    %229 = vmatpush1.msra.mxu0 0.0
    %230 = vmatprep.subr.mxu0 0.0
    %231 = vmatpush1.msra.mxu0 0.0
    %232 = vmatprep.subr.mxu0 0.0
    %233 = vmatpush1.msra.mxu0 0.0
    %234 = vmatprep.subr.mxu0 0.0
    %235 = vmatpush1.msra.mxu0 0.0
    %236 = vmatprep.subr.mxu0 0.0
    %237 = vmatpush1.msra.mxu0 0.0
    %238 = vmatprep.subr.mxu0 0.0
    %239 = vmatpush1.msra.mxu0 0.0
    %240 = vmatprep.subr.mxu0 0.0
    %241 = vmatpush1.msra.mxu0 0.0
    %242 = vmatprep.subr.mxu0 0.0
    %243 = vmatpush1.msra.mxu0 0.0
    %244 = vmatprep.subr.mxu0 0.0
    %245 = vmatpush1.msra.mxu0 0.0
    %246 = vmatprep.subr.mxu0 0.0
    %247 = vmatpush1.msra.mxu0 0.0
    %248 = vmatprep.subr.mxu0 0.0
    %249 = vmatpush1.msra.mxu0 0.0
    %250 = vmatprep.subr.mxu0 0.0
    %251 = vmatpush1.msra.mxu0 0.0
    %252 = vmatprep.subr.mxu0 0.0
    %253 = vmatpush1.msra.mxu0 0.0
    %254 = vmatprep.subr.mxu0 0.0
    %255 = vmatpush1.msra.mxu0 0.0
    %256 = vmatprep.subr.mxu0 0.0
    %257 = vmatpush1.msra.mxu0 0.0
    %258 = vmatprep.subr.mxu0 0.0
    %259 = vmatpush1.msra.mxu0 0.0
    %260 = vmatprep.subr.mxu0 0.0
    %261 = vmatpush1.msra.mxu0 0.0
    %262 = vmatprep.subr.mxu0 0.0
    %263 = vmatpush1.msra.mxu0 0.0
    %264 = vmatprep.subr.mxu0 0.0
    %265 = vmatpush1.msra.mxu0 0.0
    %266 = vmatprep.subr.mxu0 0.0
    %267 = vmatpush1.msra.mxu0 0.0
    %268 = vmatprep.subr.mxu0 0.0
    %269 = vmatpush1.msra.mxu0 0.0
    %270 = vmatprep.subr.mxu0 0.0
    %271 = vmatpush1.msra.mxu0 0.0
    %272 = vmatprep.subr.mxu0 0.0
    %273 = vmatpush1.msra.mxu0 0.0
    %274 = vmatprep.mubr.f32.mxu0 0.0
    %275 = vmatmul.mubr.f32.gmra.mrb[0].mxu0 %v208
    %v276 = vpop.f32.mrb[0].mxu0
    %v277 = vadd.f32 0.0, %v276
    %v278 = vpop.f32.mrb[0].mxu0
    %279 = vdwg.mxu0
    %vm280 = vcmask 125952
    %281 = vst.msk [vmem:[#allocation4] sm:$0xf] %vm280, %v204
    %282 = vst.msk [vmem:[#allocation4 + $0x4] sm:$0xf] %vm280, %v277
    %v283 = vld [vmem:[%s3] sm:$0xf]
    %v284 = vld [vmem:[%s3 + $0x4] sm:$0xf]
    %v285 = vcvt.f32.s32.to.zero.pseudo %v283
    %v286 = vcvt.f32.s32.to.zero.pseudo %v284
    %v287 = vlaneseq
    %v288 = vshrl.u32 %v287, 7
    %v289 = vsub.s32 0, %v288
    %v290 = vrot.slane %v285, %v289
    %v291 = vlaneseq
    %v292 = vshrl.u32 %v291, 7
    %v293 = vsub.s32 0, %v292
    %v294 = vrot.slane %v286, %v293
    %vm295 = vcmp.eq.s32.totalorder %v57, %v290
    %vm296 = vcmp.eq.s32.totalorder %v58, %v290
    %vm297 = vcmp.eq.s32.totalorder %v57, %v294
    %vm298 = vcmp.eq.s32.totalorder %v58, %v294
    %v299 = vlaneseq
    %v300 = vshrl.u32 %v299, 7
    %v301 = vsub.s32 2, %v300
    %v302 = vrot.slane %v283, %v301
    %v303 = vlaneseq
    %v304 = vshrl.u32 %v303, 7
    %v305 = vsub.s32 2, %v304
    %v306 = vrot.slane %v284, %v305
    %v307 = vsel %vm295, %v302, 0.0
    %v308 = vsel %vm296, %v302, 0.0
    %v309 = vsel %vm297, %v306, 0.0
    %v310 = vsel %vm298, %v306, 0.0
    %v311 = vlaneseq
    %v312 = vshrl.u32 %v311, 7
    %v313 = vsub.s32 1, %v312
    %v314 = vrot.slane %v285, %v313
    %v315 = vlaneseq
    %v316 = vshrl.u32 %v315, 7
    %v317 = vsub.s32 1, %v316
    %v318 = vrot.slane %v286, %v317
    %vm319 = vcmp.eq.s32.totalorder %v57, %v314
    %vm320 = vcmp.eq.s32.totalorder %v58, %v314
    %vm321 = vcmp.eq.s32.totalorder %v57, %v318
    %vm322 = vcmp.eq.s32.totalorder %v58, %v318
    %v323 = vlaneseq
    %v324 = vshrl.u32 %v323, 7
    %v325 = vsub.s32 3, %v324
    %v326 = vrot.slane %v283, %v325
    %v327 = vlaneseq
    %v328 = vshrl.u32 %v327, 7
    %v329 = vsub.s32 3, %v328
    %v330 = vrot.slane %v284, %v329
    %v331 = vsel %vm319, %v326, 0.0
    %v332 = vsel %vm320, %v326, 0.0
    %v333 = vsel %vm321, %v330, 0.0
    %v334 = vsel %vm322, %v330, 0.0
    %v335 = vadd.f32 %v307, %v331
    %v336 = vadd.f32 %v308, %v332
    %v337 = vadd.f32 %v309, %v333
    %v338 = vadd.f32 %v310, %v334
    %vm339 = vcmask 130048
    %v341 = vsel %vm339, %v204, 0
    %343 = vmatprep.subr.mxu0 0.0
    %344 = vmatpush1.msra.mxu0 %v335
    %345 = vmatprep.subr.mxu0 0.0
    %346 = vmatpush1.msra.mxu0 %v336
    %347 = vmatprep.subr.mxu0 0.0
    %348 = vmatpush1.msra.mxu0 0.0
    %349 = vmatprep.subr.mxu0 0.0
    %350 = vmatpush1.msra.mxu0 0.0
    %351 = vmatprep.subr.mxu0 0.0
    %352 = vmatpush1.msra.mxu0 0.0
    %353 = vmatprep.subr.mxu0 0.0
    %354 = vmatpush1.msra.mxu0 0.0
    %355 = vmatprep.subr.mxu0 0.0
    %356 = vmatpush1.msra.mxu0 0.0
    %357 = vmatprep.subr.mxu0 0.0
    %358 = vmatpush1.msra.mxu0 0.0
    %359 = vmatprep.subr.mxu0 0.0
    %360 = vmatpush1.msra.mxu0 0.0
    %361 = vmatprep.subr.mxu0 0.0
    %362 = vmatpush1.msra.mxu0 0.0
    %363 = vmatprep.subr.mxu0 0.0
    %364 = vmatpush1.msra.mxu0 0.0
    %365 = vmatprep.subr.mxu0 0.0
    %366 = vmatpush1.msra.mxu0 0.0
    %367 = vmatprep.subr.mxu0 0.0
    %368 = vmatpush1.msra.mxu0 0.0
    %369 = vmatprep.subr.mxu0 0.0
    %370 = vmatpush1.msra.mxu0 0.0
    %371 = vmatprep.subr.mxu0 0.0
    %372 = vmatpush1.msra.mxu0 0.0
    %373 = vmatprep.subr.mxu0 0.0
    %374 = vmatpush1.msra.mxu0 0.0
    %375 = vmatprep.subr.mxu0 0.0
    %376 = vmatpush1.msra.mxu0 0.0
    %377 = vmatprep.subr.mxu0 0.0
    %378 = vmatpush1.msra.mxu0 0.0
    %379 = vmatprep.subr.mxu0 0.0
    %380 = vmatpush1.msra.mxu0 0.0
    %381 = vmatprep.subr.mxu0 0.0
    %382 = vmatpush1.msra.mxu0 0.0
    %383 = vmatprep.subr.mxu0 0.0
    %384 = vmatpush1.msra.mxu0 0.0
    %385 = vmatprep.subr.mxu0 0.0
    %386 = vmatpush1.msra.mxu0 0.0
    %387 = vmatprep.subr.mxu0 0.0
    %388 = vmatpush1.msra.mxu0 0.0
    %389 = vmatprep.subr.mxu0 0.0
    %390 = vmatpush1.msra.mxu0 0.0
    %391 = vmatprep.subr.mxu0 0.0
    %392 = vmatpush1.msra.mxu0 0.0
    %393 = vmatprep.subr.mxu0 0.0
    %394 = vmatpush1.msra.mxu0 0.0
    %395 = vmatprep.subr.mxu0 0.0
    %396 = vmatpush1.msra.mxu0 0.0
    %397 = vmatprep.subr.mxu0 0.0
    %398 = vmatpush1.msra.mxu0 0.0
    %399 = vmatprep.subr.mxu0 0.0
    %400 = vmatpush1.msra.mxu0 0.0
    %401 = vmatprep.subr.mxu0 0.0
    %402 = vmatpush1.msra.mxu0 0.0
    %403 = vmatprep.subr.mxu0 0.0
    %404 = vmatpush1.msra.mxu0 0.0
    %405 = vmatprep.subr.mxu0 0.0
    %406 = vmatpush1.msra.mxu0 0.0
    %407 = vmatprep.mubr.f32.mxu0 0.0
    %408 = vmatmul.mubr.f32.gmra.mrb[0].mxu0 %v341
    %v409 = vpop.f32.mrb[0].mxu0
    %v410 = vadd.f32 0.0, %v409
    %v411 = vpop.f32.mrb[0].mxu0
    %412 = vdwg.mxu0
    %v414 = vsel %vm339, %v277, 0
    %416 = vmatprep.subr.mxu0 0.0
    %417 = vmatpush1.msra.mxu0 %v337
    %418 = vmatprep.subr.mxu0 0.0
    %419 = vmatpush1.msra.mxu0 %v338
    %420 = vmatprep.subr.mxu0 0.0
    %421 = vmatpush1.msra.mxu0 0.0
    %422 = vmatprep.subr.mxu0 0.0
    %423 = vmatpush1.msra.mxu0 0.0
    %424 = vmatprep.subr.mxu0 0.0
    %425 = vmatpush1.msra.mxu0 0.0
    %426 = vmatprep.subr.mxu0 0.0
    %427 = vmatpush1.msra.mxu0 0.0
    %428 = vmatprep.subr.mxu0 0.0
    %429 = vmatpush1.msra.mxu0 0.0
    %430 = vmatprep.subr.mxu0 0.0
    %431 = vmatpush1.msra.mxu0 0.0
    %432 = vmatprep.subr.mxu0 0.0
    %433 = vmatpush1.msra.mxu0 0.0
    %434 = vmatprep.subr.mxu0 0.0
    %435 = vmatpush1.msra.mxu0 0.0
    %436 = vmatprep.subr.mxu0 0.0
    %437 = vmatpush1.msra.mxu0 0.0
    %438 = vmatprep.subr.mxu0 0.0
    %439 = vmatpush1.msra.mxu0 0.0
    %440 = vmatprep.subr.mxu0 0.0
    %441 = vmatpush1.msra.mxu0 0.0
    %442 = vmatprep.subr.mxu0 0.0
    %443 = vmatpush1.msra.mxu0 0.0
    %444 = vmatprep.subr.mxu0 0.0
    %445 = vmatpush1.msra.mxu0 0.0
    %446 = vmatprep.subr.mxu0 0.0
    %447 = vmatpush1.msra.mxu0 0.0
    %448 = vmatprep.subr.mxu0 0.0
    %449 = vmatpush1.msra.mxu0 0.0
    %450 = vmatprep.subr.mxu0 0.0
    %451 = vmatpush1.msra.mxu0 0.0
    %452 = vmatprep.subr.mxu0 0.0
    %453 = vmatpush1.msra.mxu0 0.0
    %454 = vmatprep.subr.mxu0 0.0
    %455 = vmatpush1.msra.mxu0 0.0
    %456 = vmatprep.subr.mxu0 0.0
    %457 = vmatpush1.msra.mxu0 0.0
    %458 = vmatprep.subr.mxu0 0.0
    %459 = vmatpush1.msra.mxu0 0.0
    %460 = vmatprep.subr.mxu0 0.0
    %461 = vmatpush1.msra.mxu0 0.0
    %462 = vmatprep.subr.mxu0 0.0
    %463 = vmatpush1.msra.mxu0 0.0
    %464 = vmatprep.subr.mxu0 0.0
    %465 = vmatpush1.msra.mxu0 0.0
    %466 = vmatprep.subr.mxu0 0.0
    %467 = vmatpush1.msra.mxu0 0.0
    %468 = vmatprep.subr.mxu0 0.0
    %469 = vmatpush1.msra.mxu0 0.0
    %470 = vmatprep.subr.mxu0 0.0
    %471 = vmatpush1.msra.mxu0 0.0
    %472 = vmatprep.subr.mxu0 0.0
    %473 = vmatpush1.msra.mxu0 0.0
    %474 = vmatprep.subr.mxu0 0.0
    %475 = vmatpush1.msra.mxu0 0.0
    %476 = vmatprep.subr.mxu0 0.0
    %477 = vmatpush1.msra.mxu0 0.0
    %478 = vmatprep.subr.mxu0 0.0
    %479 = vmatpush1.msra.mxu0 0.0
    %480 = vmatprep.mubr.f32.mxu0 0.0
    %481 = vmatmul.mubr.f32.gmra.mrb[0].mxu0 %v414
    %v482 = vpop.f32.mrb[0].mxu0
    %v483 = vadd.f32 0.0, %v482
    %v484 = vpop.f32.mrb[0].mxu0
    %485 = vdwg.mxu0
    %vm486 = vcmask 60416
    %487 = vst.msk [vmem:[#allocation6] sm:$0xf] %vm486, %v410
    %488 = vst.msk [vmem:[#allocation6 + $0x4] sm:$0xf] %vm486, %v483
    %v489 = vld [vmem:[%s4] sm:$0xf]
    %v490 = vld [vmem:[%s4 + $0x4] sm:$0xf]
    %v491 = vcvt.f32.s32.to.zero.pseudo %v489
    %v492 = vcvt.f32.s32.to.zero.pseudo %v490
    %v493 = vlaneseq
    %v494 = vshrl.u32 %v493, 7
    %v495 = vsub.s32 0, %v494
    %v496 = vrot.slane %v491, %v495
    %v497 = vlaneseq
    %v498 = vshrl.u32 %v497, 7
    %v499 = vsub.s32 0, %v498
    %v500 = vrot.slane %v492, %v499
    %vm501 = vcmp.eq.s32.totalorder %v57, %v496
    %vm502 = vcmp.eq.s32.totalorder %v57, %v500
    %v503 = vlaneseq
    %v504 = vshrl.u32 %v503, 7
    %v505 = vsub.s32 2, %v504
    %v506 = vrot.slane %v489, %v505
    %v507 = vlaneseq
    %v508 = vshrl.u32 %v507, 7
    %v509 = vsub.s32 2, %v508
    %v510 = vrot.slane %v490, %v509
    %v511 = vsel %vm501, %v506, 0.0
    %v512 = vsel %vm502, %v510, 0.0
    %v513 = vlaneseq
    %v514 = vshrl.u32 %v513, 7
    %v515 = vsub.s32 1, %v514
    %v516 = vrot.slane %v491, %v515
    %v517 = vlaneseq
    %v518 = vshrl.u32 %v517, 7
    %v519 = vsub.s32 1, %v518
    %v520 = vrot.slane %v492, %v519
    %vm521 = vcmp.eq.s32.totalorder %v57, %v516
    %vm522 = vcmp.eq.s32.totalorder %v57, %v520
    %v523 = vlaneseq
    %v524 = vshrl.u32 %v523, 7
    %v525 = vsub.s32 3, %v524
    %v526 = vrot.slane %v489, %v525
    %v527 = vlaneseq
    %v528 = vshrl.u32 %v527, 7
    %v529 = vsub.s32 3, %v528
    %v530 = vrot.slane %v490, %v529
    %v531 = vsel %vm521, %v526, 0.0
    %v532 = vsel %vm522, %v530, 0.0
    %v533 = vadd.f32 %v511, %v531
    %v534 = vadd.f32 %v512, %v532
    %vm535 = vcmask 64512
    %v537 = vsel %vm535, %v410, 0
    %539 = vmatprep.subr.mxu0 0.0
    %540 = vmatpush1.msra.mxu0 %v533
    %541 = vmatprep.subr.mxu0 0.0
    %542 = vmatpush1.msra.mxu0 0.0
    %543 = vmatprep.subr.mxu0 0.0
    %544 = vmatpush1.msra.mxu0 0.0
    %545 = vmatprep.subr.mxu0 0.0
    %546 = vmatpush1.msra.mxu0 0.0
    %547 = vmatprep.subr.mxu0 0.0
    %548 = vmatpush1.msra.mxu0 0.0
    %549 = vmatprep.subr.mxu0 0.0
    %550 = vmatpush1.msra.mxu0 0.0
    %551 = vmatprep.subr.mxu0 0.0
    %552 = vmatpush1.msra.mxu0 0.0
    %553 = vmatprep.subr.mxu0 0.0
    %554 = vmatpush1.msra.mxu0 0.0
    %555 = vmatprep.subr.mxu0 0.0
    %556 = vmatpush1.msra.mxu0 0.0
    %557 = vmatprep.subr.mxu0 0.0
    %558 = vmatpush1.msra.mxu0 0.0
    %559 = vmatprep.subr.mxu0 0.0
    %560 = vmatpush1.msra.mxu0 0.0
    %561 = vmatprep.subr.mxu0 0.0
    %562 = vmatpush1.msra.mxu0 0.0
    %563 = vmatprep.subr.mxu0 0.0
    %564 = vmatpush1.msra.mxu0 0.0
    %565 = vmatprep.subr.mxu0 0.0
    %566 = vmatpush1.msra.mxu0 0.0
    %567 = vmatprep.subr.mxu0 0.0
    %568 = vmatpush1.msra.mxu0 0.0
    %569 = vmatprep.subr.mxu0 0.0
    %570 = vmatpush1.msra.mxu0 0.0
    %571 = vmatprep.subr.mxu0 0.0
    %572 = vmatpush1.msra.mxu0 0.0
    %573 = vmatprep.subr.mxu0 0.0
    %574 = vmatpush1.msra.mxu0 0.0
    %575 = vmatprep.subr.mxu0 0.0
    %576 = vmatpush1.msra.mxu0 0.0
    %577 = vmatprep.subr.mxu0 0.0
    %578 = vmatpush1.msra.mxu0 0.0
    %579 = vmatprep.subr.mxu0 0.0
    %580 = vmatpush1.msra.mxu0 0.0
    %581 = vmatprep.subr.mxu0 0.0
    %582 = vmatpush1.msra.mxu0 0.0
    %583 = vmatprep.subr.mxu0 0.0
    %584 = vmatpush1.msra.mxu0 0.0
    %585 = vmatprep.subr.mxu0 0.0
    %586 = vmatpush1.msra.mxu0 0.0
    %587 = vmatprep.subr.mxu0 0.0
    %588 = vmatpush1.msra.mxu0 0.0
    %589 = vmatprep.subr.mxu0 0.0
    %590 = vmatpush1.msra.mxu0 0.0
    %591 = vmatprep.subr.mxu0 0.0
    %592 = vmatpush1.msra.mxu0 0.0
    %593 = vmatprep.subr.mxu0 0.0
    %594 = vmatpush1.msra.mxu0 0.0
    %595 = vmatprep.subr.mxu0 0.0
    %596 = vmatpush1.msra.mxu0 0.0
    %597 = vmatprep.subr.mxu0 0.0
    %598 = vmatpush1.msra.mxu0 0.0
    %599 = vmatprep.subr.mxu0 0.0
    %600 = vmatpush1.msra.mxu0 0.0
    %601 = vmatprep.subr.mxu0 0.0
    %602 = vmatpush1.msra.mxu0 0.0
    %603 = vmatprep.mubr.f32.mxu0 0.0
    %604 = vmatmul.mubr.f32.gmra.mrb[0].mxu0 %v537
    %v605 = vpop.f32.mrb[0].mxu0
    %v606 = vadd.f32 0.0, %v605
    %v607 = vpop.f32.mrb[0].mxu0
    %608 = vdwg.mxu0
    %v610 = vsel %vm535, %v483, 0
    %612 = vmatprep.subr.mxu0 0.0
    %613 = vmatpush1.msra.mxu0 %v534
    %614 = vmatprep.subr.mxu0 0.0
    %615 = vmatpush1.msra.mxu0 0.0
    %616 = vmatprep.subr.mxu0 0.0
    %617 = vmatpush1.msra.mxu0 0.0
    %618 = vmatprep.subr.mxu0 0.0
    %619 = vmatpush1.msra.mxu0 0.0
    %620 = vmatprep.subr.mxu0 0.0
    %621 = vmatpush1.msra.mxu0 0.0
    %622 = vmatprep.subr.mxu0 0.0
    %623 = vmatpush1.msra.mxu0 0.0
    %624 = vmatprep.subr.mxu0 0.0
    %625 = vmatpush1.msra.mxu0 0.0
    %626 = vmatprep.subr.mxu0 0.0
    %627 = vmatpush1.msra.mxu0 0.0
    %628 = vmatprep.subr.mxu0 0.0
    %629 = vmatpush1.msra.mxu0 0.0
    %630 = vmatprep.subr.mxu0 0.0
    %631 = vmatpush1.msra.mxu0 0.0
    %632 = vmatprep.subr.mxu0 0.0
    %633 = vmatpush1.msra.mxu0 0.0
    %634 = vmatprep.subr.mxu0 0.0
    %635 = vmatpush1.msra.mxu0 0.0
    %636 = vmatprep.subr.mxu0 0.0
    %637 = vmatpush1.msra.mxu0 0.0
    %638 = vmatprep.subr.mxu0 0.0
    %639 = vmatpush1.msra.mxu0 0.0
    %640 = vmatprep.subr.mxu0 0.0
    %641 = vmatpush1.msra.mxu0 0.0
    %642 = vmatprep.subr.mxu0 0.0
    %643 = vmatpush1.msra.mxu0 0.0
    %644 = vmatprep.subr.mxu0 0.0
    %645 = vmatpush1.msra.mxu0 0.0
    %646 = vmatprep.subr.mxu0 0.0
    %647 = vmatpush1.msra.mxu0 0.0
    %648 = vmatprep.subr.mxu0 0.0
    %649 = vmatpush1.msra.mxu0 0.0
    %650 = vmatprep.subr.mxu0 0.0
    %651 = vmatpush1.msra.mxu0 0.0
    %652 = vmatprep.subr.mxu0 0.0
    %653 = vmatpush1.msra.mxu0 0.0
    %654 = vmatprep.subr.mxu0 0.0
    %655 = vmatpush1.msra.mxu0 0.0
    %656 = vmatprep.subr.mxu0 0.0
    %657 = vmatpush1.msra.mxu0 0.0
    %658 = vmatprep.subr.mxu0 0.0
    %659 = vmatpush1.msra.mxu0 0.0
    %660 = vmatprep.subr.mxu0 0.0
    %661 = vmatpush1.msra.mxu0 0.0
    %662 = vmatprep.subr.mxu0 0.0
    %663 = vmatpush1.msra.mxu0 0.0
    %664 = vmatprep.subr.mxu0 0.0
    %665 = vmatpush1.msra.mxu0 0.0
    %666 = vmatprep.subr.mxu0 0.0
    %667 = vmatpush1.msra.mxu0 0.0
    %668 = vmatprep.subr.mxu0 0.0
    %669 = vmatpush1.msra.mxu0 0.0
    %670 = vmatprep.subr.mxu0 0.0
    %671 = vmatpush1.msra.mxu0 0.0
    %672 = vmatprep.subr.mxu0 0.0
    %673 = vmatpush1.msra.mxu0 0.0
    %674 = vmatprep.subr.mxu0 0.0
    %675 = vmatpush1.msra.mxu0 0.0
    %676 = vmatprep.mubr.f32.mxu0 0.0
    %677 = vmatmul.mubr.f32.gmra.mrb[0].mxu0 %v610
    %v678 = vpop.f32.mrb[0].mxu0
    %v679 = vadd.f32 0.0, %v678
    %v680 = vpop.f32.mrb[0].mxu0
    %681 = vdwg.mxu0
    %vm682 = vcmask 27648
    %683 = vst.msk [vmem:[#allocation7] sm:$0xf] %vm682, %v606
    %684 = vst.msk [vmem:[#allocation7 + $0x4] sm:$0xf] %vm682, %v679
    %v685 = vld [vmem:[%s5] sm:$0xf]
    %v686 = vld [vmem:[%s5 + $0x4] sm:$0xf]
    %v687 = vcvt.f32.s32.to.zero.pseudo %v685
    %v688 = vcvt.f32.s32.to.zero.pseudo %v686
    %v689 = vlaneseq
    %v690 = vshrl.u32 %v689, 7
    %v691 = vsub.s32 0, %v690
    %v692 = vrot.slane %v687, %v691
    %v693 = vlaneseq
    %v694 = vshrl.u32 %v693, 7
    %v695 = vsub.s32 0, %v694
    %v696 = vrot.slane %v688, %v695
    %vm697 = vcmp.eq.s32.totalorder %v57, %v692
    %vm698 = vcmp.eq.s32.totalorder %v57, %v696
    %v699 = vlaneseq
    %v700 = vshrl.u32 %v699, 7
    %v701 = vsub.s32 2, %v700
    %v702 = vrot.slane %v685, %v701
    %v703 = vlaneseq
    %v704 = vshrl.u32 %v703, 7
    %v705 = vsub.s32 2, %v704
    %v706 = vrot.slane %v686, %v705
    %v707 = vsel %vm697, %v702, 0.0
    %v708 = vsel %vm698, %v706, 0.0
    %v709 = vlaneseq
    %v710 = vshrl.u32 %v709, 7
    %v711 = vsub.s32 1, %v710
    %v712 = vrot.slane %v687, %v711
    %v713 = vlaneseq
    %v714 = vshrl.u32 %v713, 7
    %v715 = vsub.s32 1, %v714
    %v716 = vrot.slane %v688, %v715
    %vm717 = vcmp.eq.s32.totalorder %v57, %v712
    %vm718 = vcmp.eq.s32.totalorder %v57, %v716
    %v719 = vlaneseq
    %v720 = vshrl.u32 %v719, 7
    %v721 = vsub.s32 3, %v720
    %v722 = vrot.slane %v685, %v721
    %v723 = vlaneseq
    %v724 = vshrl.u32 %v723, 7
    %v725 = vsub.s32 3, %v724
    %v726 = vrot.slane %v686, %v725
    %v727 = vsel %vm717, %v722, 0.0
    %v728 = vsel %vm718, %v726, 0.0
    %v729 = vadd.f32 %v707, %v727
    %v730 = vadd.f32 %v708, %v728
    %vm731 = vcmask 31744
    %v733 = vsel %vm731, %v606, 0
    %vm735 = vcmask 1043456
    %v737 = vsel %vm735, %v729, 0
    %739 = vmatprep.subr.mxu0 0.0
    %740 = vmatpush1.msra.mxu0 %v737
    %741 = vmatprep.subr.mxu0 0.0
    %742 = vmatpush1.msra.mxu0 0.0
    %743 = vmatprep.subr.mxu0 0.0
    %744 = vmatpush1.msra.mxu0 0.0
    %745 = vmatprep.subr.mxu0 0.0
    %746 = vmatpush1.msra.mxu0 0.0
    %747 = vmatprep.subr.mxu0 0.0
    %748 = vmatpush1.msra.mxu0 0.0
    %749 = vmatprep.subr.mxu0 0.0
    %750 = vmatpush1.msra.mxu0 0.0
    %751 = vmatprep.subr.mxu0 0.0
    %752 = vmatpush1.msra.mxu0 0.0
    %753 = vmatprep.subr.mxu0 0.0
    %754 = vmatpush1.msra.mxu0 0.0
    %755 = vmatprep.subr.mxu0 0.0
    %756 = vmatpush1.msra.mxu0 0.0
    %757 = vmatprep.subr.mxu0 0.0
    %758 = vmatpush1.msra.mxu0 0.0
    %759 = vmatprep.subr.mxu0 0.0
    %760 = vmatpush1.msra.mxu0 0.0
    %761 = vmatprep.subr.mxu0 0.0
    %762 = vmatpush1.msra.mxu0 0.0
    %763 = vmatprep.subr.mxu0 0.0
    %764 = vmatpush1.msra.mxu0 0.0
    %765 = vmatprep.subr.mxu0 0.0
    %766 = vmatpush1.msra.mxu0 0.0
    %767 = vmatprep.subr.mxu0 0.0
    %768 = vmatpush1.msra.mxu0 0.0
    %769 = vmatprep.subr.mxu0 0.0
    %770 = vmatpush1.msra.mxu0 0.0
    %771 = vmatprep.subr.mxu0 0.0
    %772 = vmatpush1.msra.mxu0 0.0
    %773 = vmatprep.subr.mxu0 0.0
    %774 = vmatpush1.msra.mxu0 0.0
    %775 = vmatprep.subr.mxu0 0.0
    %776 = vmatpush1.msra.mxu0 0.0
    %777 = vmatprep.subr.mxu0 0.0
    %778 = vmatpush1.msra.mxu0 0.0
    %779 = vmatprep.subr.mxu0 0.0
    %780 = vmatpush1.msra.mxu0 0.0
    %781 = vmatprep.subr.mxu0 0.0
    %782 = vmatpush1.msra.mxu0 0.0
    %783 = vmatprep.subr.mxu0 0.0
    %784 = vmatpush1.msra.mxu0 0.0
    %785 = vmatprep.subr.mxu0 0.0
    %786 = vmatpush1.msra.mxu0 0.0
    %787 = vmatprep.subr.mxu0 0.0
    %788 = vmatpush1.msra.mxu0 0.0
    %789 = vmatprep.subr.mxu0 0.0
    %790 = vmatpush1.msra.mxu0 0.0
    %791 = vmatprep.subr.mxu0 0.0
    %792 = vmatpush1.msra.mxu0 0.0
    %793 = vmatprep.subr.mxu0 0.0
    %794 = vmatpush1.msra.mxu0 0.0
    %795 = vmatprep.subr.mxu0 0.0
    %796 = vmatpush1.msra.mxu0 0.0
    %797 = vmatprep.subr.mxu0 0.0
    %798 = vmatpush1.msra.mxu0 0.0
    %799 = vmatprep.subr.mxu0 0.0
    %800 = vmatpush1.msra.mxu0 0.0
    %801 = vmatprep.subr.mxu0 0.0
    %802 = vmatpush1.msra.mxu0 0.0
    %803 = vmatprep.mubr.f32.mxu0 0.0
    %804 = vmatmul.mubr.f32.gmra.mrb[0].mxu0 %v733
    %v805 = vpop.f32.mrb[0].mxu0
    %v806 = vadd.f32 0.0, %v805
    %v807 = vpop.f32.mrb[0].mxu0
    %808 = vdwg.mxu0
    %v810 = vsel %vm731, %v679, 0
    %v813 = vsel %vm735, %v730, 0
    %815 = vmatprep.subr.mxu0 0.0
    %816 = vmatpush1.msra.mxu0 %v813
    %817 = vmatprep.subr.mxu0 0.0
    %818 = vmatpush1.msra.mxu0 0.0
    %819 = vmatprep.subr.mxu0 0.0
    %820 = vmatpush1.msra.mxu0 0.0
    %821 = vmatprep.subr.mxu0 0.0
    %822 = vmatpush1.msra.mxu0 0.0
    %823 = vmatprep.subr.mxu0 0.0
    %824 = vmatpush1.msra.mxu0 0.0
    %825 = vmatprep.subr.mxu0 0.0
    %826 = vmatpush1.msra.mxu0 0.0
    %827 = vmatprep.subr.mxu0 0.0
    %828 = vmatpush1.msra.mxu0 0.0
    %829 = vmatprep.subr.mxu0 0.0
    %830 = vmatpush1.msra.mxu0 0.0
    %831 = vmatprep.subr.mxu0 0.0
    %832 = vmatpush1.msra.mxu0 0.0
    %833 = vmatprep.subr.mxu0 0.0
    %834 = vmatpush1.msra.mxu0 0.0
    %835 = vmatprep.subr.mxu0 0.0
    %836 = vmatpush1.msra.mxu0 0.0
    %837 = vmatprep.subr.mxu0 0.0
    %838 = vmatpush1.msra.mxu0 0.0
    %839 = vmatprep.subr.mxu0 0.0
    %840 = vmatpush1.msra.mxu0 0.0
    %841 = vmatprep.subr.mxu0 0.0
    %842 = vmatpush1.msra.mxu0 0.0
    %843 = vmatprep.subr.mxu0 0.0
    %844 = vmatpush1.msra.mxu0 0.0
    %845 = vmatprep.subr.mxu0 0.0
    %846 = vmatpush1.msra.mxu0 0.0
    %847 = vmatprep.subr.mxu0 0.0
    %848 = vmatpush1.msra.mxu0 0.0
    %849 = vmatprep.subr.mxu0 0.0
    %850 = vmatpush1.msra.mxu0 0.0
    %851 = vmatprep.subr.mxu0 0.0
    %852 = vmatpush1.msra.mxu0 0.0
    %853 = vmatprep.subr.mxu0 0.0
    %854 = vmatpush1.msra.mxu0 0.0
    %855 = vmatprep.subr.mxu0 0.0
    %856 = vmatpush1.msra.mxu0 0.0
    %857 = vmatprep.subr.mxu0 0.0
    %858 = vmatpush1.msra.mxu0 0.0
    %859 = vmatprep.subr.mxu0 0.0
    %860 = vmatpush1.msra.mxu0 0.0
    %861 = vmatprep.subr.mxu0 0.0
    %862 = vmatpush1.msra.mxu0 0.0
    %863 = vmatprep.subr.mxu0 0.0
    %864 = vmatpush1.msra.mxu0 0.0
    %865 = vmatprep.subr.mxu0 0.0
    %866 = vmatpush1.msra.mxu0 0.0
    %867 = vmatprep.subr.mxu0 0.0
    %868 = vmatpush1.msra.mxu0 0.0
    %869 = vmatprep.subr.mxu0 0.0
    %870 = vmatpush1.msra.mxu0 0.0
    %871 = vmatprep.subr.mxu0 0.0
    %872 = vmatpush1.msra.mxu0 0.0
    %873 = vmatprep.subr.mxu0 0.0
    %874 = vmatpush1.msra.mxu0 0.0
    %875 = vmatprep.subr.mxu0 0.0
    %876 = vmatpush1.msra.mxu0 0.0
    %877 = vmatprep.subr.mxu0 0.0
    %878 = vmatpush1.msra.mxu0 0.0
    %879 = vmatprep.mubr.f32.mxu0 0.0
    %880 = vmatmul.mubr.f32.gmra.mrb[0].mxu0 %v810
    %v881 = vpop.f32.mrb[0].mxu0
    %v882 = vadd.f32 0.0, %v881
    %v883 = vpop.f32.mrb[0].mxu0
    %884 = vdwg.mxu0
    %vm885 = vcmask 11264
    %886 = vst.msk [vmem:[%s10] sm:$0xf] %vm885, %v806
    %887 = vst.msk [vmem:[%s10 + $0x4] sm:$0xf] %vm885, %v882
    // Predicated region
    $region26: #{resizer_backbone_forward.1} parent=1 // pred_check
      _
    $region27: #{resizer_backbone_forward.1} parent=1 // pred_check_branch
      %889 = sbr.rel (0) target = $region29
    $region28: #{resizer_backbone_forward.1} parent=1 // pred_region
      %s891 = ssub.s32 128, 128
      %892 = vsyncadd [#allocation3], %s891
      %s893 = sshll.u32 [#allocation2], 4
      %s894 = int_to_ptr.vmem [resolvable:$true] %s893
      %899 = dma.vmem_to_hbm [thread:$0]  %s894, 128, %s6, [#allocation3], 64, 64, 4
    $region29: #{resizer_backbone_forward.1} parent=1 // pred_fallthru
      _
    // Predicated region
    $region30: #{resizer_backbone_forward.1} parent=1 // pred_check
      _
    $region31: #{resizer_backbone_forward.1} parent=1 // pred_check_branch
      %901 = sbr.rel (0) target = $region33
    $region32: #{resizer_backbone_forward.1} parent=1 // pred_region
      %s903 = ssub.s32 128, 128
      %904 = vsyncadd [#allocation5], %s903
      %s905 = sshll.u32 [#allocation4], 4
      %s906 = int_to_ptr.vmem [resolvable:$true] %s905
      %911 = dma.vmem_to_hbm [thread:$0]  %s906, 128, %s7, [#allocation5], 64, 64, 4
    $region33: #{resizer_backbone_forward.1} parent=1 // pred_fallthru
      _
    // Predicated region
    $region34: #{resizer_backbone_forward.1} parent=1 // pred_check
      _
    $region35: #{resizer_backbone_forward.1} parent=1 // pred_check_branch
      %913 = sbr.rel (0) target = $region37
    $region36: #{resizer_backbone_forward.1} parent=1 // pred_region
      %s915 = ssub.s32 128, 128
      %916 = vsyncadd [#allocation5], %s915
      %s917 = sshll.u32 [#allocation6], 4
      %s918 = int_to_ptr.vmem [resolvable:$true] %s917
      %923 = dma.vmem_to_hbm [thread:$0]  %s918, 128, %s8, [#allocation5], 64, 64, 4
    $region37: #{resizer_backbone_forward.1} parent=1 // pred_fallthru
      _
    // Predicated region
    $region38: #{resizer_backbone_forward.1} parent=1 // pred_check
      _
    $region39: #{resizer_backbone_forward.1} parent=1 // pred_check_branch
      %925 = sbr.rel (0) target = $region41
    $region40: #{resizer_backbone_forward.1} parent=1 // pred_region
      %s927 = ssub.s32 128, 128
      %928 = vsyncadd [#allocation8], %s927
      %s929 = sshll.u32 [#allocation7], 4
      %s930 = int_to_ptr.vmem [resolvable:$true] %s929
      %935 = dma.vmem_to_hbm [thread:$0]  %s930, 128, %s9, [#allocation8], 64, 64, 4
    $region41: #{resizer_backbone_forward.1} parent=1 // pred_fallthru
      _
    // Predicated region
    $region42: #{resizer_backbone_forward.1} parent=1 // pred_check
      _
    $region43: #{resizer_backbone_forward.1} parent=1 // pred_check_branch
      %937 = sbr.rel (0) target = $region45
    $region44: #{resizer_backbone_forward.1} parent=1 // pred_region
      _
    $region45: #{resizer_backbone_forward.1} parent=1 // pred_fallthru
      _
    // Predicated region
    $region46: #{resizer_backbone_forward.1} parent=1 // pred_check
      _
    $region47: #{resizer_backbone_forward.1} parent=1 // pred_check_branch
      %939 = sbr.rel (0) target = $region49
    $region48: #{resizer_backbone_forward.1} parent=1 // pred_region
      %940 = dma.done [#allocation3], 128
    $region49: #{resizer_backbone_forward.1} parent=1 // pred_fallthru
      _
    // Predicated region
    $region50: #{resizer_backbone_forward.1} parent=1 // pred_check
      _
    $region51: #{resizer_backbone_forward.1} parent=1 // pred_check_branch
      %942 = sbr.rel (0) target = $region53
    $region52: #{resizer_backbone_forward.1} parent=1 // pred_region
      %943 = dma.done [#allocation5], 128
    $region53: #{resizer_backbone_forward.1} parent=1 // pred_fallthru
      _
    // Predicated region
    $region54: #{resizer_backbone_forward.1} parent=1 // pred_check
      _
    $region55: #{resizer_backbone_forward.1} parent=1 // pred_check_branch
      %945 = sbr.rel (0) target = $region57
    $region56: #{resizer_backbone_forward.1} parent=1 // pred_region
      %946 = dma.done [#allocation5], 128
    $region57: #{resizer_backbone_forward.1} parent=1 // pred_fallthru
      _
    // Predicated region
    $region58: #{resizer_backbone_forward.1} parent=1 // pred_check
      _
    $region59: #{resizer_backbone_forward.1} parent=1 // pred_check_branch
      %948 = sbr.rel (0) target = $region61
    $region60: #{resizer_backbone_forward.1} parent=1 // pred_region
      %949 = dma.done [#allocation8], 128
    $region61: #{resizer_backbone_forward.1} parent=1 // pred_fallthru
      _
    // Predicated region
    $region62: #{resizer_backbone_forward.1} parent=1 // pred_check
      _
    $region63: #{resizer_backbone_forward.1} parent=1 // pred_check_branch
      %951 = sbr.rel (0) target = $region65
    $region64: #{resizer_backbone_forward.1} parent=1 // pred_region
      _
    $region65: #{resizer_backbone_forward.1} parent=1 // pred_fallthru
      _
    %952 = vsyncpa [#allocation3], 1
    %953 = vsyncpa [#allocation5], 1
    %954 = vsyncpa [#allocation8], 1

</llo_original>
